<compile_context>
chip_gen: v6e
topology: v6e:2x2x1
jax: 0.10.0
libtpu: 0.0.40
codegen_flags: <defaults>
</compile_context>

<pallas_src>
import functools

import jax
import jax.numpy as jnp
import numpy as np
from jax.experimental import pallas as pl
from jax.experimental.pallas import tpu as pltpu


def _pick_row_tile(b):
    """Largest row tile (multiple of 8, <= 512) that divides the batch."""
    for t in (512, 256, 128, 64, 32, 16, 8):
        if b % t == 0:
            return t
    raise ValueError(f"batch size {b} must be a multiple of 8")


# ----------------------------------------------------------------------------
# Fused ITC kernel:
#   CLS-patch projection -> mlp_vision, mlp_text on pooled text, L2 norm,
#   scaled similarity logits, symmetric cross-entropy ClipLoss.
#
# Grid: (nb,) over image-row tiles of the (B, B) logits.
#   step 0      : project + normalize ALL text features into a resident
#                 output block, reset the online column-LSE scratch.
#   every step  : project + normalize one tile of image features (2 MXU dots),
#                 one (tb, d) x (d, B) MXU dot for the logits tile, row-wise
#                 logsumexp + diagonal (row dot, no eye mask) accumulated into
#                 an SMEM scalar, column-wise logsumexp accumulated online in
#                 VMEM scratch (max, sum) so XLU work stays per-tile.
#   last step   : combine into the scalar loss.
# ----------------------------------------------------------------------------
def _clipall_itc_kernel(patches_cls_ref, text_pooled_ref, patch_proj_ref,
                        w_vis_ref, w_text_ref, scale_ref,
                        loss_ref, lpi_ref, imgn_ref, txtn_ref,
                        m_c, s_c, acc):
    i = pl.program_id(0)
    nb = pl.num_programs(0)
    tb, b = lpi_ref.shape
    scale = scale_ref[0, 0]                               # exp(logit_scale)

    @pl.when(i == 0)
    def _init():
        # mlp_text on the pooled text tokens (bf16 in / f32 acc) + L2 norm.
        txt = jnp.dot(text_pooled_ref[...], w_text_ref[...],
                      preferred_element_type=jnp.float32)
        # eps guards a zero-norm row (torch's bare x / x.norm() would NaN).
        txtn_ref[...] = txt * jax.lax.rsqrt(
            jnp.sum(txt * txt, axis=-1, keepdims=True) + 1e-12)
        m_c[...] = jnp.full_like(m_c, -jnp.inf)
        s_c[...] = jnp.zeros_like(s_c)
        acc[0] = jnp.float32(0.0)

    # Vision path, CLS row only: patch embedding -> mlp_vision (two MXU dots,
    # bf16 operands / f32 accumulation), then L2 normalize via rsqrt (EUP).
    hid = jnp.dot(patches_cls_ref[...], patch_proj_ref[...],
                  preferred_element_type=jnp.float32)
    img = jnp.dot(hid.astype(jnp.bfloat16), w_vis_ref[...],
                  preferred_element_type=jnp.float32)
    img_n = img * jax.lax.rsqrt(
        jnp.sum(img * img, axis=-1, keepdims=True) + 1e-12)
    imgn_ref[...] = img_n

    # logits_per_image tile = scale * img_n @ txt_n.T  (the only BxB matmul;
    # logits_per_text is its exact transpose, taken for free in the wrapper).
    txt_n = txtn_ref[...]
    lpi = scale * jax.lax.dot_general(
        img_n.astype(jnp.bfloat16), txt_n.astype(jnp.bfloat16),
        (((1,), (1,)), ((), ())), preferred_element_type=jnp.float32)
    lpi_ref[...] = lpi

    # Diagonal entries for this row tile: cheap row-wise dot, no BxB eye mask.
    r0 = pl.multiple_of(i * tb, tb)
    txt_rows = txtn_ref[pl.ds(r0, tb), :]
    diag = scale * jnp.sum(img_n * txt_rows, axis=-1, keepdims=True)

    # image->text direction: row-wise logsumexp, complete within this tile.
    m_r = jnp.max(lpi, axis=-1, keepdims=True)
    lse_r = m_r + jnp.log(jnp.sum(jnp.exp(lpi - m_r), axis=-1, keepdims=True))
    acc[0] = acc[0] + 0.5 * jnp.sum(lse_r) - jnp.sum(diag)

    # text->image direction: online column-wise logsumexp across row tiles.
    col_max = jnp.max(lpi, axis=0, keepdims=True)
    m_new = jnp.maximum(m_c[...], col_max)
    s_c[...] = (s_c[...] * jnp.exp(m_c[...] - m_new)
                + jnp.sum(jnp.exp(lpi - m_new), axis=0, keepdims=True))
    m_c[...] = m_new

    @pl.when(i == nb - 1)
    def _finalize():
        col_lse = m_c[...] + jnp.log(s_c[...])                     # (1, B)
        # 0.5*(CE(lpi, arange) + CE(lpi.T, arange))
        loss_ref[0, 0] = (acc[0] + 0.5 * jnp.sum(col_lse)) / b


def clipall_itc(patches_cls, text_pooled, patch_proj, w_vis_t, w_text_t,
                logit_scale_exp):
    """Fused ITC stage -> (loss[1,1], logits_per_image, image_n, text_n)."""
    B, patch_dim = patches_cls.shape
    d_vis = patch_proj.shape[1]
    d_txt, d_emb = w_text_t.shape
    tb = _pick_row_tile(B)
    nb = B // tb

    scale_arr = jnp.reshape(logit_scale_exp.astype(jnp.float32), (1, 1))
    smem = pl.BlockSpec(memory_space=pltpu.MemorySpace.SMEM)

    grid_spec = pltpu.PrefetchScalarGridSpec(
        num_scalar_prefetch=0,
        grid=(nb,),
        in_specs=[
            pl.BlockSpec((tb, patch_dim), lambda i: (i, 0)),   # CLS patches
            pl.BlockSpec((B, d_txt), lambda i: (0, 0)),        # pooled text
            pl.BlockSpec((patch_dim, d_vis), lambda i: (0, 0)),
            pl.BlockSpec((d_vis, d_emb), lambda i: (0, 0)),
            pl.BlockSpec((d_txt, d_emb), lambda i: (0, 0)),
            smem,                                              # exp(logit_scale)
        ],
        out_specs=(
            smem,                                              # loss (1, 1)
            pl.BlockSpec((tb, B), lambda i: (i, 0)),           # logits_per_image
            pl.BlockSpec((tb, d_emb), lambda i: (i, 0)),       # image feats
            pl.BlockSpec((B, d_emb), lambda i: (0, 0)),        # text feats (resident)
        ),
        scratch_shapes=[
            pltpu.VMEM((1, B), jnp.float32),    # online column-LSE max
            pltpu.VMEM((1, B), jnp.float32),    # online column-LSE sum
            pltpu.SMEM((1,), jnp.float32),      # running 0.5*sum(lse_r) - sum(diag)
        ],
    )
    out_shape = (
        jax.ShapeDtypeStruct((1, 1), jnp.float32),
        jax.ShapeDtypeStruct((B, B), jnp.float32),
        jax.ShapeDtypeStruct((B, d_emb), jnp.float32),
        jax.ShapeDtypeStruct((B, d_emb), jnp.float32),
    )
    return pl.pallas_call(
        _clipall_itc_kernel,
        out_shape=out_shape,
        grid_spec=grid_spec,
        compiler_params=pltpu.CompilerParams(
            # "arbitrary": the column-LSE scratch and resident text block carry
            # across row tiles (see header TODO about a v7x megacore split).
            dimension_semantics=("arbitrary",),
            # Explicit budget (per review): well under v7x's 64 MiB physical /
            # 32 MiB default scoped VMEM even at multi-thousand batch sizes.
            vmem_limit_bytes=32 * 1024 * 1024),
    )(patches_cls.astype(jnp.bfloat16),
      text_pooled.astype(jnp.bfloat16),
      patch_proj.astype(jnp.bfloat16),
      w_vis_t.astype(jnp.bfloat16),
      w_text_t.astype(jnp.bfloat16),
      scale_arr)


# ----------------------------------------------------------------------------
# Parameters (deterministic, synthetic - no checkpoint load)
# ----------------------------------------------------------------------------
def init_params(key, *, vocab, d_txt, d_vis, d_emb, patch_dim):
    k1, k2, k3, k4 = jax.random.split(key, 4)

    def trunc_normal(k, shape, std=0.02):
        return (jax.random.truncated_normal(k, -1.0, 1.0, shape, jnp.float32)
                * std)

    return {
        # stand-in encoder weights (stub for the pretrained CLIP backbones)
        "token_emb": trunc_normal(k1, (vocab, d_txt), std=0.02),
        "patch_proj": trunc_normal(k2, (patch_dim, d_vis), std=0.02),
        # CLIPALL's own parameters
        "w_text_t": trunc_normal(k3, (d_txt, d_emb), std=0.02),  # mlp_text.weight^T
        "w_vis_t": trunc_normal(k4, (d_vis, d_emb), std=0.02),   # mlp_vision.weight^T
        "logit_scale": jnp.asarray(np.log(1.0 / 0.07), jnp.float32),
    }


# ----------------------------------------------------------------------------
# Forward pass
# ----------------------------------------------------------------------------
@functools.partial(jax.jit, static_argnames=("patch",))
def clipall_forward(params, input_ids, pixel_values, attention_mask, *, patch=4):
    del attention_mask  # consumed only by the (stubbed) text backbone
    B, _ = input_ids.shape
    C = pixel_values.shape[1]

    # Stand-in text encoder + EOS pooling fused into one B-row gather:
    # mlp_text(emb(input_ids))[arange, eos] == mlp_text(emb(input_ids[arange, eos]))
    eos_idx = jnp.argmax(input_ids.astype(jnp.int32), axis=-1)
    eos_tok = jnp.take_along_axis(input_ids, eos_idx[:, None], axis=-1)[:, 0]
    text_pooled = params["token_emb"][eos_tok]                  # (B, d_txt)

    # Stand-in vision encoder: only the CLS patch row feeds the pooled path,
    # so only that row (pixel patch (0,0), flattened as (C, p, p)) is extracted;
    # its projection happens inside the fused kernel.
    patches_cls = pixel_values[:, :, :patch, :patch].reshape(B, C * patch * patch)

    loss, logits_per_image, image_n, text_n = clipall_itc(
        patches_cls, text_pooled, params["patch_proj"],
        params["w_vis_t"], params["w_text_t"],
        jnp.exp(params["logit_scale"]))
    logits_per_text = logits_per_image.T       # exact transpose (free glue)

    # TODO(synk): cross-transformer branch / negative mining skipped (see header).
    return {
        "loss": loss[0, 0],
        "image_embeds": image_n,
        "text_embeds": text_n,
        "logits_per_image": logits_per_image,
        "logits_per_text": logits_per_text,
    }


# ----------------------------------------------------------------------------
# Pure-JAX f32 reference (computed in the ORIGINAL torch order: full-sequence
# projections, then pooling) - validates the fold-to-CLS-row optimization.
# ----------------------------------------------------------------------------
def _patchify(pixel_values, patch):
    B, C, H, W = pixel_values.shape
    hp, wp = H // patch, W // patch
    x = pixel_values.reshape(B, C, hp, patch, wp, patch)
    x = x.transpose(0, 2, 4, 1, 3, 5).reshape(B, hp * wp, C * patch * patch)
    return x


def reference_forward(params, input_ids, pixel_values, *, patch=4):
    B, _ = input_ids.shape
    text_embeds = params["token_emb"][input_ids]                # (B, Lt, d_txt)
    patches = _patchify(pixel_values, patch)                    # (B, Lv, pd)
    image_embeds = patches @ params["patch_proj"]               # (B, Lv, d_vis)
    text_feat = text_embeds @ params["w_text_t"]                # (B, Lt, d_emb)
    image_feat = image_embeds @ params["w_vis_t"]               # (B, Lv, d_emb)
    image_feat = image_feat[:, 0, :]
    eos_idx = jnp.argmax(input_ids.astype(jnp.int32), axis=-1)
    text_feat = text_feat[jnp.arange(B), eos_idx]
    img_n = image_feat / jnp.linalg.norm(image_feat, axis=-1, keepdims=True)
    txt_n = text_feat / jnp.linalg.norm(text_feat, axis=-1, keepdims=True)
    scale = jnp.exp(params["logit_scale"])
    lpi = scale * img_n @ txt_n.T
    lpt = scale * txt_n @ img_n.T

    def ce(logits):
        lse = jax.nn.logsumexp(logits, axis=-1)
        return jnp.mean(lse - jnp.diagonal(logits))

    loss = 0.5 * (ce(lpi) + ce(lpt))
    return loss, lpi, img_n, txt_n


# ----------------------------------------------------------------------------
if __name__ == "__main__":
    key = jax.random.PRNGKey(0)
    k_ids, k_pix, k_par = jax.random.split(key, 3)

    B, Lt = 8, 8                # batch (multiple of 8), text sequence length
    C, H, W = 3, 16, 16         # pixel_values (NCHW), 4x4 patches -> 16 tokens
    patch = 4
    vocab = 64
    d_txt, d_vis, d_emb = 128, 128, 128   # 128-aligned -> lane-dense blocks
    patch_dim = C * patch * patch

    input_ids = jax.random.randint(k_ids, (B, Lt), 1, vocab, dtype=jnp.int32)
    pixel_values = jax.random.normal(k_pix, (B, C, H, W), jnp.float32)
    attention_mask = jnp.ones((B, Lt), jnp.int32)

    params = init_params(k_par, vocab=vocab, d_txt=d_txt, d_vis=d_vis,
                         d_emb=d_emb, patch_dim=patch_dim)

    out = clipall_forward(params, input_ids, pixel_values, attention_mask,
                          patch=patch)
    out = jax.block_until_ready(out)

    loss = float(out["loss"])
    assert np.isfinite(loss), "loss is not finite"
    assert out["image_embeds"].shape == (B, d_emb)
    assert out["text_embeds"].shape == (B, d_emb)
    assert out["logits_per_image"].shape == (B, B)
    # logits_per_text is a bit-exact transpose of logits_per_image
    np.testing.assert_array_equal(np.asarray(out["logits_per_text"]),
                                  np.asarray(out["logits_per_image"]).T)
    # normalized features have unit L2 norm
    np.testing.assert_allclose(
        np.linalg.norm(np.asarray(out["image_embeds"]), axis=-1), 1.0, atol=1e-3)
    np.testing.assert_allclose(
        np.linalg.norm(np.asarray(out["text_embeds"]), axis=-1), 1.0, atol=1e-3)
    # pure-JAX f32 reference check (kernel runs bf16 MXU operands, hence the
    # slightly relaxed tolerances)
    ref_loss, ref_lpi, _, _ = reference_forward(
        params, input_ids, pixel_values, patch=patch)
    np.testing.assert_allclose(loss, float(ref_loss), rtol=3e-2, atol=5e-2)
    np.testing.assert_allclose(np.asarray(out["logits_per_image"]),
                               np.asarray(ref_lpi), rtol=3e-2, atol=1e-1)
    print("KERNEL_OK")
</pallas_src>

<mosaic_0001>
module attributes {stable_mosaic.version = 11 : i64} {
  func.func @_clipall_itc_kernel(%arg0: i32, %arg1: memref<8x48xbf16, #tpu.memory_space<vmem>>, %arg2: memref<8x128xbf16, #tpu.memory_space<vmem>>, %arg3: memref<48x128xbf16, #tpu.memory_space<vmem>>, %arg4: memref<128x128xbf16, #tpu.memory_space<vmem>>, %arg5: memref<128x128xbf16, #tpu.memory_space<vmem>>, %arg6: memref<1x1xf32, #tpu.memory_space<smem>>, %arg7: memref<1x1xf32, #tpu.memory_space<smem>>, %arg8: memref<8x8xf32, #tpu.memory_space<vmem>>, %arg9: memref<8x128xf32, #tpu.memory_space<vmem>>, %arg10: memref<8x128xf32, #tpu.memory_space<vmem>>, %arg11: memref<1x8xf32, #tpu.memory_space<vmem>>, %arg12: memref<1x8xf32, #tpu.memory_space<vmem>>, %arg13: memref<1xf32, #tpu.memory_space<smem>>) attributes {dimension_semantics = [#tpu.dimension_semantics<arbitrary>], iteration_bounds = array<i64: 1>, scalar_prefetch = 0 : i64, scratch_operands = 3 : i64, tpu.core_type = #tpu.core_type<tc>, window_params = [{transform_indices = @transform_0, window_bounds = array<i64: 8, 48>}, {pipeline_mode = #tpu.pipeline_mode<synchronous>, transform_indices = @transform_1, window_bounds = array<i64: 8, 128>}, {pipeline_mode = #tpu.pipeline_mode<synchronous>, transform_indices = @transform_2, window_bounds = array<i64: 48, 128>}, {pipeline_mode = #tpu.pipeline_mode<synchronous>, transform_indices = @transform_3, window_bounds = array<i64: 128, 128>}, {pipeline_mode = #tpu.pipeline_mode<synchronous>, transform_indices = @transform_4, window_bounds = array<i64: 128, 128>}, {transform_indices = @transform_5, window_bounds = array<i64: 1, 1>}, {transform_indices = @transform_6, window_bounds = array<i64: 1, 1>}, {transform_indices = @transform_7, window_bounds = array<i64: 8, 8>}, {transform_indices = @transform_8, window_bounds = array<i64: 8, 128>}, {pipeline_mode = #tpu.pipeline_mode<synchronous>, transform_indices = @transform_9, window_bounds = array<i64: 8, 128>}]} {
    %c0 = arith.constant 0 : index
    %c0_0 = arith.constant 0 : index
    %0 = memref.load %arg6[%c0, %c0_0] : memref<1x1xf32, #tpu.memory_space<smem>>
    %c0_i32 = arith.constant 0 : i32
    %1 = arith.cmpi eq, %arg0, %c0_i32 : i32
    %2 = arith.extui %1 : i1 to i32
    %c0_i32_1 = arith.constant 0 : i32
    %3 = arith.cmpi ne, %2, %c0_i32_1 : i32
    scf.if %3 {
      %c0_41 = arith.constant 0 : index
      %c0_42 = arith.constant 0 : index
      %77 = vector.load %arg2[%c0_41, %c0_42] : memref<8x128xbf16, #tpu.memory_space<vmem>>, vector<8x128xbf16>
      %c0_43 = arith.constant 0 : index
      %c0_44 = arith.constant 0 : index
      %78 = vector.load %arg5[%c0_43, %c0_44] : memref<128x128xbf16, #tpu.memory_space<vmem>>, vector<128x128xbf16>
      %cst_45 = arith.constant dense<0.000000e+00> : vector<8x128xf32>
      %79 = tpu.matmul %77, %78, %cst_45 {dimension_numbers = #tpu.dot_dimension_numbers<[1], [0], [0], [1], [0, 0, 1, 1], [], []>} : vector<8x128xbf16>, vector<128x128xbf16>, vector<8x128xf32> -> vector<8x128xf32>
      %80 = arith.mulf %79, %79 : vector<8x128xf32>
      %cst_46 = arith.constant dense<0.000000e+00> : vector<8xf32>
      %81 = vector.multi_reduction <add>, %80, %cst_46 [1] : vector<8x128xf32> to vector<8xf32>
      %82 = vector.shape_cast %81 : vector<8xf32> to vector<8x1xf32>
      %cst_47 = arith.constant 9.99999996E-13 : f32
      %83 = vector.broadcast %cst_47 : f32 to vector<8x1xf32>
      %84 = arith.addf %82, %83 : vector<8x1xf32>
      %85 = math.rsqrt %84 : vector<8x1xf32>
      %86 = vector.broadcast %85 : vector<8x1xf32> to vector<8x128xf32>
      %87 = arith.mulf %79, %86 : vector<8x128xf32>
      %c0_48 = arith.constant 0 : index
      %c0_49 = arith.constant 0 : index
      %88 = vector.load %arg10[%c0_48, %c0_49] : memref<8x128xf32, #tpu.memory_space<vmem>>, vector<8x128xf32>
      tpu.vector_store %arg10[%c0_48, %c0_49], %87 {strides = array<i32>} : memref<8x128xf32, #tpu.memory_space<vmem>>, vector<8x128xf32>,
      %cst_50 = arith.constant 0xFF800000 : f32
      %89 = vector.broadcast %cst_50 : f32 to vector<1x8xf32>
      %c0_51 = arith.constant 0 : index
      %c0_52 = arith.constant 0 : index
      %90 = vector.load %arg11[%c0_51, %c0_52] : memref<1x8xf32, #tpu.memory_space<vmem>>, vector<1x8xf32>
      tpu.vector_store %arg11[%c0_51, %c0_52], %89 {strides = array<i32>} : memref<1x8xf32, #tpu.memory_space<vmem>>, vector<1x8xf32>,
      %cst_53 = arith.constant 0.000000e+00 : f32
      %91 = vector.broadcast %cst_53 : f32 to vector<1x8xf32>
      %c0_54 = arith.constant 0 : index
      %c0_55 = arith.constant 0 : index
      %92 = vector.load %arg12[%c0_54, %c0_55] : memref<1x8xf32, #tpu.memory_space<vmem>>, vector<1x8xf32>
      tpu.vector_store %arg12[%c0_54, %c0_55], %91 {strides = array<i32>} : memref<1x8xf32, #tpu.memory_space<vmem>>, vector<1x8xf32>,
      %cst_56 = arith.constant 0.000000e+00 : f32
      %c0_57 = arith.constant 0 : index
      %93 = memref.load %arg13[%c0_57] : memref<1xf32, #tpu.memory_space<smem>>
      memref.store %cst_56, %arg13[%c0_57] : memref<1xf32, #tpu.memory_space<smem>>
    } else {
    }
    %c0_2 = arith.constant 0 : index
    %c0_3 = arith.constant 0 : index
    %4 = vector.load %arg1[%c0_2, %c0_3] : memref<8x48xbf16, #tpu.memory_space<vmem>>, vector<8x48xbf16>
    %c0_4 = arith.constant 0 : index
    %c0_5 = arith.constant 0 : index
    %5 = vector.load %arg3[%c0_4, %c0_5] : memref<48x128xbf16, #tpu.memory_space<vmem>>, vector<48x128xbf16>
    %cst = arith.constant dense<0.000000e+00> : vector<8x128xf32>
    %6 = tpu.matmul %4, %5, %cst {dimension_numbers = #tpu.dot_dimension_numbers<[1], [0], [0], [1], [0, 0, 1, 1], [], []>} : vector<8x48xbf16>, vector<48x128xbf16>, vector<8x128xf32> -> vector<8x128xf32>
    %7 = arith.truncf %6 : vector<8x128xf32> to vector<8x128xbf16>
    %c0_6 = arith.constant 0 : index
    %c0_7 = arith.constant 0 : index
    %8 = vector.load %arg4[%c0_6, %c0_7] : memref<128x128xbf16, #tpu.memory_space<vmem>>, vector<128x128xbf16>
    %cst_8 = arith.constant dense<0.000000e+00> : vector<8x128xf32>
    %9 = tpu.matmul %7, %8, %cst_8 {dimension_numbers = #tpu.dot_dimension_numbers<[1], [0], [0], [1], [0, 0, 1, 1], [], []>} : vector<8x128xbf16>, vector<128x128xbf16>, vector<8x128xf32> -> vector<8x128xf32>
    %10 = arith.mulf %9, %9 : vector<8x128xf32>
    %cst_9 = arith.constant dense<0.000000e+00> : vector<8xf32>
    %11 = vector.multi_reduction <add>, %10, %cst_9 [1] : vector<8x128xf32> to vector<8xf32>
    %12 = vector.shape_cast %11 : vector<8xf32> to vector<8x1xf32>
    %cst_10 = arith.constant 9.99999996E-13 : f32
    %13 = vector.broadcast %cst_10 : f32 to vector<8x1xf32>
    %14 = arith.addf %12, %13 : vector<8x1xf32>
    %15 = math.rsqrt %14 : vector<8x1xf32>
    %16 = vector.broadcast %15 : vector<8x1xf32> to vector<8x128xf32>
    %17 = arith.mulf %9, %16 : vector<8x128xf32>
    %c0_11 = arith.constant 0 : index
    %c0_12 = arith.constant 0 : index
    %18 = vector.load %arg9[%c0_11, %c0_12] : memref<8x128xf32, #tpu.memory_space<vmem>>, vector<8x128xf32>
    tpu.vector_store %arg9[%c0_11, %c0_12], %17 {strides = array<i32>} : memref<8x128xf32, #tpu.memory_space<vmem>>, vector<8x128xf32>,
    %c0_13 = arith.constant 0 : index
    %c0_14 = arith.constant 0 : index
    %19 = vector.load %arg10[%c0_13, %c0_14] : memref<8x128xf32, #tpu.memory_space<vmem>>, vector<8x128xf32>
    %20 = arith.truncf %17 : vector<8x128xf32> to vector<8x128xbf16>
    %21 = arith.truncf %19 : vector<8x128xf32> to vector<8x128xbf16>
    %cst_15 = arith.constant dense<0.000000e+00> : vector<8x8xf32>
    %22 = tpu.matmul %20, %21, %cst_15 {dimension_numbers = #tpu.dot_dimension_numbers<[1], [1], [0], [0], [0, 0, 1, 0], [], []>} : vector<8x128xbf16>, vector<8x128xbf16>, vector<8x8xf32> -> vector<8x8xf32>
    %23 = vector.broadcast %0 : f32 to vector<8x8xf32>
    %24 = arith.mulf %23, %22 : vector<8x8xf32>
    %c0_16 = arith.constant 0 : index
    %c0_17 = arith.constant 0 : index
    %25 = vector.load %arg8[%c0_16, %c0_17] : memref<8x8xf32, #tpu.memory_space<vmem>>, vector<8x8xf32>
    tpu.vector_store %arg8[%c0_16, %c0_17], %24 {strides = array<i32>} : memref<8x8xf32, #tpu.memory_space<vmem>>, vector<8x8xf32>,
    %c8_i32 = arith.constant 8 : i32
    %26 = arith.muli %arg0, %c8_i32 : i32
    %27 = tpu.assume_multiple %26, 8 : i32
    %28 = arith.index_cast %27 : i32 to index
    %c0_18 = arith.constant 0 : index
    %29 = vector.load %arg10[%28, %c0_18] : memref<8x128xf32, #tpu.memory_space<vmem>>, vector<8x128xf32>
    %30 = arith.mulf %17, %29 : vector<8x128xf32>
    %cst_19 = arith.constant dense<0.000000e+00> : vector<8xf32>
    %31 = vector.multi_reduction <add>, %30, %cst_19 [1] : vector<8x128xf32> to vector<8xf32>
    %32 = vector.shape_cast %31 : vector<8xf32> to vector<8x1xf32>
    %33 = vector.broadcast %0 : f32 to vector<8x1xf32>
    %34 = arith.mulf %33, %32 : vector<8x1xf32>
    %cst_20 = arith.constant dense<0xFF800000> : vector<8xf32>
    %35 = vector.multi_reduction <maximumf>, %24, %cst_20 [1] : vector<8x8xf32> to vector<8xf32>
    %36 = vector.shape_cast %35 : vector<8xf32> to vector<8x1xf32>
    %37 = vector.broadcast %36 : vector<8x1xf32> to vector<8x8xf32>
    %38 = arith.subf %24, %37 : vector<8x8xf32>
    %39 = math.exp %38 : vector<8x8xf32>
    %cst_21 = arith.constant dense<0.000000e+00> : vector<8xf32>
    %40 = vector.multi_reduction <add>, %39, %cst_21 [1] : vector<8x8xf32> to vector<8xf32>
    %41 = vector.shape_cast %40 : vector<8xf32> to vector<8x1xf32>
    %42 = math.log %41 : vector<8x1xf32>
    %43 = arith.addf %36, %42 : vector<8x1xf32>
    %c0_22 = arith.constant 0 : index
    %44 = memref.load %arg13[%c0_22] : memref<1xf32, #tpu.memory_space<smem>>
    %45 = vector.shape_cast %43 : vector<8x1xf32> to vector<1x8x1xf32>
    %cst_23 = arith.constant dense<0.000000e+00> : vector<1xf32>
    %46 = vector.multi_reduction <add>, %45, %cst_23 [1, 2] : vector<1x8x1xf32> to vector<1xf32>
    %47 = vector.shape_cast %46 : vector<1xf32> to vector<1x1x1xf32>
    %48 = vector.extract %47[0, 0, 0] : f32 from vector<1x1x1xf32>
    %cst_24 = arith.constant 5.000000e-01 : f32
    %49 = arith.mulf %cst_24, %48 : f32
    %50 = arith.addf %44, %49 : f32
    %51 = vector.shape_cast %34 : vector<8x1xf32> to vector<1x8x1xf32>
    %cst_25 = arith.constant dense<0.000000e+00> : vector<1xf32>
    %52 = vector.multi_reduction <add>, %51, %cst_25 [1, 2] : vector<1x8x1xf32> to vector<1xf32>
    %53 = vector.shape_cast %52 : vector<1xf32> to vector<1x1x1xf32>
    %54 = vector.extract %53[0, 0, 0] : f32 from vector<1x1x1xf32>
    %55 = arith.subf %50, %54 : f32
    %c0_26 = arith.constant 0 : index
    %56 = memref.load %arg13[%c0_26] : memref<1xf32, #tpu.memory_space<smem>>
    memref.store %55, %arg13[%c0_26] : memref<1xf32, #tpu.memory_space<smem>>
    %cst_27 = arith.constant dense<0xFF800000> : vector<8xf32>
    %57 = vector.multi_reduction <maximumf>, %24, %cst_27 [0] : vector<8x8xf32> to vector<8xf32>
    %58 = vector.shape_cast %57 : vector<8xf32> to vector<1x8xf32>
    %c0_28 = arith.constant 0 : index
    %c0_29 = arith.constant 0 : index
    %59 = vector.load %arg11[%c0_28, %c0_29] : memref<1x8xf32, #tpu.memory_space<vmem>>, vector<1x8xf32>
    %60 = arith.maximumf %59, %58 : vector<1x8xf32>
    %c0_30 = arith.constant 0 : index
    %c0_31 = arith.constant 0 : index
    %61 = vector.load %arg12[%c0_30, %c0_31] : memref<1x8xf32, #tpu.memory_space<vmem>>, vector<1x8xf32>
    %c0_32 = arith.constant 0 : index
    %c0_33 = arith.constant 0 : index
    %62 = vector.load %arg11[%c0_32, %c0_33] : memref<1x8xf32, #tpu.memory_space<vmem>>, vector<1x8xf32>
    %63 = arith.subf %62, %60 : vector<1x8xf32>
    %64 = math.exp %63 : vector<1x8xf32>
    %65 = arith.mulf %61, %64 : vector<1x8xf32>
    %66 = vector.broadcast %60 : vector<1x8xf32> to vector<8x8xf32>
    %67 = arith.subf %24, %66 : vector<8x8xf32>
    %68 = math.exp %67 : vector<8x8xf32>
    %cst_34 = arith.constant dense<0.000000e+00> : vector<8xf32>
    %69 = vector.multi_reduction <add>, %68, %cst_34 [0] : vector<8x8xf32> to vector<8xf32>
    %70 = vector.shape_cast %69 : vector<8xf32> to vector<1x8xf32>
    %71 = arith.addf %65, %70 : vector<1x8xf32>
    %c0_35 = arith.constant 0 : index
    %c0_36 = arith.constant 0 : index
    %72 = vector.load %arg12[%c0_35, %c0_36] : memref<1x8xf32, #tpu.memory_space<vmem>>, vector<1x8xf32>
    tpu.vector_store %arg12[%c0_35, %c0_36], %71 {strides = array<i32>} : memref<1x8xf32, #tpu.memory_space<vmem>>, vector<1x8xf32>,
    %c0_37 = arith.constant 0 : index
    %c0_38 = arith.constant 0 : index
    %73 = vector.load %arg11[%c0_37, %c0_38] : memref<1x8xf32, #tpu.memory_space<vmem>>, vector<1x8xf32>
    tpu.vector_store %arg11[%c0_37, %c0_38], %60 {strides = array<i32>} : memref<1x8xf32, #tpu.memory_space<vmem>>, vector<1x8xf32>,
    %c0_i32_39 = arith.constant 0 : i32
    %74 = arith.cmpi eq, %arg0, %c0_i32_39 : i32
    %75 = arith.extui %74 : i1 to i32
    %c0_i32_40 = arith.constant 0 : i32
    %76 = arith.cmpi ne, %75, %c0_i32_40 : i32
    scf.if %76 {
      %c0_41 = arith.constant 0 : index
      %c0_42 = arith.constant 0 : index
      %77 = vector.load %arg11[%c0_41, %c0_42] : memref<1x8xf32, #tpu.memory_space<vmem>>, vector<1x8xf32>
      %c0_43 = arith.constant 0 : index
      %c0_44 = arith.constant 0 : index
      %78 = vector.load %arg12[%c0_43, %c0_44] : memref<1x8xf32, #tpu.memory_space<vmem>>, vector<1x8xf32>
      %79 = math.log %78 : vector<1x8xf32>
      %80 = arith.addf %77, %79 : vector<1x8xf32>
      %c0_45 = arith.constant 0 : index
      %81 = memref.load %arg13[%c0_45] : memref<1xf32, #tpu.memory_space<smem>>
      %82 = vector.shape_cast %80 : vector<1x8xf32> to vector<1x1x8xf32>
      %cst_46 = arith.constant dense<0.000000e+00> : vector<1xf32>
      %83 = vector.multi_reduction <add>, %82, %cst_46 [1, 2] : vector<1x1x8xf32> to vector<1xf32>
      %84 = vector.shape_cast %83 : vector<1xf32> to vector<1x1x1xf32>
      %85 = vector.extract %84[0, 0, 0] : f32 from vector<1x1x1xf32>
      %cst_47 = arith.constant 5.000000e-01 : f32
      %86 = arith.mulf %cst_47, %85 : f32
      %87 = arith.addf %81, %86 : f32
      %cst_48 = arith.constant 8.000000e+00 : f32
      %88 = arith.divf %87, %cst_48 : f32
      %c0_49 = arith.constant 0 : index
      %c0_50 = arith.constant 0 : index
      %89 = memref.load %arg7[%c0_49, %c0_50] : memref<1x1xf32, #tpu.memory_space<smem>>
      memref.store %88, %arg7[%c0_49, %c0_50] : memref<1x1xf32, #tpu.memory_space<smem>>
    } else {
    }
    return
  }
  func.func @transform_0(%arg0: i32) -> (i32, i32) {
    %c0_i32 = arith.constant 0 : i32
    %c0_i32_0 = arith.constant 0 : i32
    return %arg0, %c0_i32 : i32, i32
  }
  func.func @transform_1(%arg0: i32) -> (i32, i32) {
    %c0_i32 = arith.constant 0 : i32
    %c0_i32_0 = arith.constant 0 : i32
    %c0_i32_1 = arith.constant 0 : i32
    return %c0_i32, %c0_i32_0 : i32, i32
  }
  func.func @transform_2(%arg0: i32) -> (i32, i32) {
    %c0_i32 = arith.constant 0 : i32
    %c0_i32_0 = arith.constant 0 : i32
    %c0_i32_1 = arith.constant 0 : i32
    return %c0_i32, %c0_i32_0 : i32, i32
  }
  func.func @transform_3(%arg0: i32) -> (i32, i32) {
    %c0_i32 = arith.constant 0 : i32
    %c0_i32_0 = arith.constant 0 : i32
    %c0_i32_1 = arith.constant 0 : i32
    return %c0_i32, %c0_i32_0 : i32, i32
  }
  func.func @transform_4(%arg0: i32) -> (i32, i32) {
    %c0_i32 = arith.constant 0 : i32
    %c0_i32_0 = arith.constant 0 : i32
    %c0_i32_1 = arith.constant 0 : i32
    return %c0_i32, %c0_i32_0 : i32, i32
  }
  func.func @transform_5(%arg0: i32) -> (i32, i32) {
    %c0_i32 = arith.constant 0 : i32
    %c0_i32_0 = arith.constant 0 : i32
    %c0_i32_1 = arith.constant 0 : i32
    return %c0_i32, %c0_i32_0 : i32, i32
  }
  func.func @transform_6(%arg0: i32) -> (i32, i32) {
    %c0_i32 = arith.constant 0 : i32
    %c0_i32_0 = arith.constant 0 : i32
    %c0_i32_1 = arith.constant 0 : i32
    return %c0_i32, %c0_i32_0 : i32, i32
  }
  func.func @transform_7(%arg0: i32) -> (i32, i32) {
    %c0_i32 = arith.constant 0 : i32
    %c0_i32_0 = arith.constant 0 : i32
    return %arg0, %c0_i32 : i32, i32
  }
  func.func @transform_8(%arg0: i32) -> (i32, i32) {
    %c0_i32 = arith.constant 0 : i32
    %c0_i32_0 = arith.constant 0 : i32
    return %arg0, %c0_i32 : i32, i32
  }
  func.func @transform_9(%arg0: i32) -> (i32, i32) {
    %c0_i32 = arith.constant 0 : i32
    %c0_i32_0 = arith.constant 0 : i32
    %c0_i32_1 = arith.constant 0 : i32
    return %c0_i32, %c0_i32_0 : i32, i32
  }
}

</mosaic_0001>

<llo_original>
// kernel: clipall_forward.1
$region0: #{clipall_forward.1}
  #allocation0 [shape = 'u32[]', space=smem, size = 0x4, offset = 0x4, fixed_abs, tag = 'smem constant byte address 0x4 - core index']
  #allocation1 [shape = 'u32[144,128]{1,0:T(1,128)}', space=vmem, size = 0x12000, scoped, tag = 'internal scratch']
  #allocation2 [shape = 'f32[1,8]{1,0:T(1,128)}', space=vmem, size = 0x200, scoped, tag = 'scratch operand']
  #allocation3 [shape = 'f32[1,8]{1,0:T(1,128)}', space=vmem, size = 0x200, scoped, tag = 'scratch operand']
  #allocation4 [shape = 'f32[1]{0:T(128)}', space=smem, size = 0x200, scoped, tag = 'scratch operand']
  #allocation5 [shape = 'f32[1,1]{1,0:T(1,128)S(6)}', space=smem, size = 0x200, scoped, tag = 'scoped memory for clipall_forward.1']
  %s0 = inlined_call_operand.vmem [shape: bf16[8,48], index: 0, kind: input, shape index: {}]
  %s1 = inlined_call_operand.vmem [shape: bf16[8,128], index: 1, kind: input, shape index: {}]
  %s2 = inlined_call_operand.vmem [shape: bf16[48,128], index: 2, kind: input, shape index: {}]
  %s3 = inlined_call_operand.vmem [shape: bf16[128,128], index: 3, kind: input, shape index: {}]
  %s4 = inlined_call_operand.vmem [shape: bf16[128,128], index: 4, kind: input, shape index: {}]
  %s5 = inlined_call_operand.<no memory space> [shape: f32[1,1], index: 5, kind: input, shape index: {}]
  %s6 = inlined_call_operand.hbm [shape: f32[1,1], index: 6, kind: output, shape index: {0}]
  %s7 = inlined_call_operand.vmem [shape: f32[8,8], index: 7, kind: output, shape index: {1}]
  %s8 = inlined_call_operand.hbm [shape: f32[8,128], index: 8, kind: output, shape index: {2}]
  %s9 = inlined_call_operand.hbm [shape: f32[8,128], index: 9, kind: output, shape index: {3}]
  %10 = xla_tuple %s6, %s7, %s8, %s9
  %s11 = sld [smem:[#allocation0]]
  $region66: #{clipall_forward.1} parent=0
    _
  %s13 = ssub.s32 1, %s11
  %s14 = scalar_select 0, %s13, %s11
  %15 = sst [smem:[#allocation5]] %s5
  $region1: #{clipall_forward.1} parent=0
    #allocation6 [shape = 'u8[512]{0}', space=smem, size = 0x200, scoped, tag = 'output window, operand 0, single buffered']
    #allocation7 [shape = 's32[1]{0}', space=sflag, size = 0x4, scoped, tag = 'scoped memory for clipall_forward.1']
    #allocation8 [shape = 's32[1]{0}', space=sflag, size = 0x4, scoped, tag = 'scoped memory for clipall_forward.1']
    #allocation9 [shape = 'u8[4096]{0}', space=vmem, size = 0x1000, scoped, tag = 'output window, operand 2, single buffered']
    #allocation10 [shape = 'u8[4096]{0}', space=vmem, size = 0x1000, scoped, tag = 'output window, operand 3, single buffered']
    #allocation11 [shape = 's32[1]{0}', space=sflag, size = 0x4, scoped, tag = 'scoped memory for clipall_forward.1']
    %16 = vsyncpa [#allocation8], 0
    %17 = vsyncpa [#allocation7], 0
    %18 = vsyncpa [#allocation11], 0
    // Predicated region
    $region2: #{clipall_forward.1} parent=1 // pred_check
      _
    $region3: #{clipall_forward.1} parent=1 // pred_check_branch
      %20 = sbr.rel (0) target = $region5
    $region4: #{clipall_forward.1} parent=1 // pred_region
      _
    $region5: #{clipall_forward.1} parent=1 // pred_fallthru
      _
    // Predicated region
    $region6: #{clipall_forward.1} parent=1 // pred_check
      _
    $region7: #{clipall_forward.1} parent=1 // pred_check_branch
      %22 = sbr.rel (0) target = $region9
    $region8: #{clipall_forward.1} parent=1 // pred_region
      _
    $region9: #{clipall_forward.1} parent=1 // pred_fallthru
      _
    // Predicated region
    $region10: #{clipall_forward.1} parent=1 // pred_check
      _
    $region11: #{clipall_forward.1} parent=1 // pred_check_branch
      %24 = sbr.rel (0) target = $region13
    $region12: #{clipall_forward.1} parent=1 // pred_region
      _
    $region13: #{clipall_forward.1} parent=1 // pred_fallthru
      _
    // Predicated region
    $region14: #{clipall_forward.1} parent=1 // pred_check
      _
    $region15: #{clipall_forward.1} parent=1 // pred_check_branch
      %26 = sbr.rel (0) target = $region17
    $region16: #{clipall_forward.1} parent=1 // pred_region
      _
    $region17: #{clipall_forward.1} parent=1 // pred_fallthru
      _
    // Predicated region
    $region18: #{clipall_forward.1} parent=1 // pred_check
      _
    $region19: #{clipall_forward.1} parent=1 // pred_check_branch
      %28 = sbr.rel (0) target = $region21
    $region20: #{clipall_forward.1} parent=1 // pred_region
      _
    $region21: #{clipall_forward.1} parent=1 // pred_fallthru
      _
    // Predicated region
    $region22: #{clipall_forward.1} parent=1 // pred_check
      _
    $region23: #{clipall_forward.1} parent=1 // pred_check_branch
      %30 = sbr.rel (0) target = $region25
    $region24: #{clipall_forward.1} parent=1 // pred_region
      _
    $region25: #{clipall_forward.1} parent=1 // pred_fallthru
      _
    %s32 = sld [smem:[#allocation5]]
    %p33 = scmp.eq.s32.totalorder 0, 0
    // Predicated region
    $region26: #{clipall_forward.1} parent=1 // pred_check
      %p34 = pneg %p33
    $region27: #{clipall_forward.1} parent=1 // pred_check_branch
      %36 = sbr.rel (%p34) target = $region29
    $region28: #{clipall_forward.1} parent=1 // pred_region
      %v37 = vld [vmem:[%s1] sm:$0xf]
      %v38 = vld [vmem:[%s4] sm:$0xf]
      %v39 = vld [vmem:[%s4 + $0x4] sm:$0xf]
      %v40 = vld [vmem:[%s4 + $0x8] sm:$0xf]
      %v41 = vld [vmem:[%s4 + $0xc] sm:$0xf]
      %v42 = vld [vmem:[%s4 + $0x10] sm:$0xf]
      %v43 = vld [vmem:[%s4 + $0x14] sm:$0xf]
      %v44 = vld [vmem:[%s4 + $0x18] sm:$0xf]
      %v45 = vld [vmem:[%s4 + $0x1c] sm:$0xf]
      %v46 = vld [vmem:[%s4 + $0x20] sm:$0xf]
      %v47 = vld [vmem:[%s4 + $0x24] sm:$0xf]
      %v48 = vld [vmem:[%s4 + $0x28] sm:$0xf]
      %v49 = vld [vmem:[%s4 + $0x2c] sm:$0xf]
      %v50 = vld [vmem:[%s4 + $0x30] sm:$0xf]
      %v51 = vld [vmem:[%s4 + $0x34] sm:$0xf]
      %v52 = vld [vmem:[%s4 + $0x38] sm:$0xf]
      %v53 = vld [vmem:[%s4 + $0x3c] sm:$0xf]
      %v70 = vunpack.c.l.b16 %v38
      %v71 = vunpack.c.l.b16 %v39
      %v72 = vunpack.c.l.b16 %v40
      %v73 = vunpack.c.l.b16 %v41
      %v74 = vunpack.c.l.b16 %v42
      %v75 = vunpack.c.l.b16 %v43
      %v76 = vunpack.c.l.b16 %v44
      %v77 = vunpack.c.l.b16 %v45
      %v78 = vunpack.c.l.b16 %v46
      %v79 = vunpack.c.l.b16 %v47
      %v80 = vunpack.c.l.b16 %v48
      %v81 = vunpack.c.l.b16 %v49
      %v82 = vunpack.c.l.b16 %v50
      %v83 = vunpack.c.l.b16 %v51
      %v84 = vunpack.c.l.b16 %v52
      %v85 = vunpack.c.l.b16 %v53
      %v86 = vpack.c.b16 %v71, %v70
      %v87 = vpack.c.b16 %v73, %v72
      %v88 = vpack.c.b16 %v75, %v74
      %v89 = vpack.c.b16 %v77, %v76
      %v90 = vpack.c.b16 %v79, %v78
      %v91 = vpack.c.b16 %v81, %v80
      %v92 = vpack.c.b16 %v83, %v82
      %v93 = vpack.c.b16 %v85, %v84
      %102 = vmatprep.subr.bf16.mxu0 0
      %103 = vmatpush1.bf16.msra.mxu0 %v93
      %104 = vmatprep.subr.bf16.mxu0 0
      %105 = vmatpush1.bf16.msra.mxu0 %v92
      %106 = vmatprep.subr.bf16.mxu0 0
      %107 = vmatpush1.bf16.msra.mxu0 %v91
      %108 = vmatprep.subr.bf16.mxu0 0
      %109 = vmatpush1.bf16.msra.mxu0 %v90
      %110 = vmatprep.subr.bf16.mxu0 0
      %111 = vmatpush1.bf16.msra.mxu0 %v89
      %112 = vmatprep.subr.bf16.mxu0 0
      %113 = vmatpush1.bf16.msra.mxu0 %v88
      %114 = vmatprep.subr.bf16.mxu0 0
      %115 = vmatpush1.bf16.msra.mxu0 %v87
      %116 = vmatprep.subr.bf16.mxu0 0
      %117 = vmatpush1.bf16.msra.mxu0 %v86
      %118 = vmatprep.subr.bf16.mxu0 0
      %119 = vmatpush2.bf16.msra.mxu0 0
      %120 = vmatprep.subr.bf16.mxu0 0
      %121 = vmatpush2.bf16.msra.mxu0 0
      %122 = vmatprep.subr.bf16.mxu0 0
      %123 = vmatpush2.bf16.msra.mxu0 0
      %124 = vmatprep.subr.bf16.mxu0 0
      %125 = vmatpush2.bf16.msra.mxu0 0
      %126 = vmatprep.subr.bf16.mxu0 0
      %127 = vmatpush2.bf16.msra.mxu0 0
      %128 = vmatprep.subr.bf16.mxu0 0
      %129 = vmatpush2.bf16.msra.mxu0 0
      %130 = vmatprep.subr.bf16.mxu0 0
      %131 = vmatpush2.bf16.msra.mxu0 0
      %132 = vmatprep.subr.bf16.mxu0 0
      %133 = vmatpush2.bf16.msra.mxu0 0
      %134 = vmatprep.mubr.bf16.mxu0 0
      %135 = vmatmul.mubr.bf16.gmra.mxu0 %v37
      %v136 = vpop.f32.mrf.mxu0
      %v137 = vadd.f32 0.0, %v136
      %v138 = vpop.f32.mrf.mxu0
      %v139 = vpop.f32.mrf.mxu0
      %v140 = vpop.f32.mrf.mxu0
      %141 = vdwg.mxu0
      %v142 = vmul.f32 %v137, %v137
      %143 = vadd.xlane.f32.xlu0 %v142
      %v144 = vpop.xlane.xlu0 %143
      %v145 = vadd.f32 %v144, 1e-12
      %v146 = vrsqrt.pop %v145
      %v147 = vmul.f32 %v137, %v146
      %148 = vst [vmem:[#allocation10] sm:$0xff] %v147
      %vm149 = vcmask 57344
      %150 = vst.msk [vmem:[#allocation2] sm:$0x1] %vm149, -inf
      %151 = vst.msk [vmem:[#allocation3] sm:$0x1] %vm149, 0.0
      %s152 = scalar_lea.smem [#allocation4], 0
      %153 = sst [smem:[%s152]] 0.0
    $region29: #{clipall_forward.1} parent=1 // pred_fallthru
      _
    %v154 = vld [vmem:[%s0] sm:$0xf]
    %v155 = vld [vmem:[%s2] sm:$0xf]
    %v156 = vld [vmem:[%s2 + $0x4] sm:$0xf]
    %v157 = vld [vmem:[%s2 + $0x8] sm:$0xf]
    %v158 = vld [vmem:[%s2 + $0xc] sm:$0xf]
    %v159 = vld [vmem:[%s2 + $0x10] sm:$0xf]
    %v160 = vld [vmem:[%s2 + $0x14] sm:$0xf]
    %v167 = vunpack.c.l.b16 %v155
    %v168 = vunpack.c.l.b16 %v156
    %v169 = vunpack.c.l.b16 %v157
    %v170 = vunpack.c.l.b16 %v158
    %v171 = vunpack.c.l.b16 %v159
    %v172 = vunpack.c.l.b16 %v160
    %v173 = vpack.c.b16 %v168, %v167
    %v174 = vpack.c.b16 %v170, %v169
    %v175 = vpack.c.b16 %v172, %v171
    %vm179 = vcmask 392192
    %v181 = vsel %vm179, %v154, 0
    %183 = vmatprep.subr.bf16.mxu0 0
    %184 = vmatpush1.bf16.msra.mxu0 0
    %185 = vmatprep.subr.bf16.mxu0 0
    %186 = vmatpush1.bf16.msra.mxu0 0
    %187 = vmatprep.subr.bf16.mxu0 0
    %188 = vmatpush1.bf16.msra.mxu0 0
    %189 = vmatprep.subr.bf16.mxu0 0
    %190 = vmatpush1.bf16.msra.mxu0 0
    %191 = vmatprep.subr.bf16.mxu0 0
    %192 = vmatpush1.bf16.msra.mxu0 0
    %193 = vmatprep.subr.bf16.mxu0 0
    %194 = vmatpush1.bf16.msra.mxu0 %v175
    %195 = vmatprep.subr.bf16.mxu0 0
    %196 = vmatpush1.bf16.msra.mxu0 %v174
    %197 = vmatprep.subr.bf16.mxu0 0
    %198 = vmatpush1.bf16.msra.mxu0 %v173
    %199 = vmatprep.subr.bf16.mxu0 0
    %200 = vmatpush2.bf16.msra.mxu0 0
    %201 = vmatprep.subr.bf16.mxu0 0
    %202 = vmatpush2.bf16.msra.mxu0 0
    %203 = vmatprep.subr.bf16.mxu0 0
    %204 = vmatpush2.bf16.msra.mxu0 0
    %205 = vmatprep.subr.bf16.mxu0 0
    %206 = vmatpush2.bf16.msra.mxu0 0
    %207 = vmatprep.subr.bf16.mxu0 0
    %208 = vmatpush2.bf16.msra.mxu0 0
    %209 = vmatprep.subr.bf16.mxu0 0
    %210 = vmatpush2.bf16.msra.mxu0 0
    %211 = vmatprep.subr.bf16.mxu0 0
    %212 = vmatpush2.bf16.msra.mxu0 0
    %213 = vmatprep.subr.bf16.mxu0 0
    %214 = vmatpush2.bf16.msra.mxu0 0
    %215 = vmatprep.mubr.bf16.mxu0 0
    %216 = vmatmul.mubr.bf16.gmra.mxu0 %v181
    %v217 = vpop.f32.mrf.mxu0
    %v218 = vadd.f32 0.0, %v217
    %v219 = vpop.f32.mrf.mxu0
    %v220 = vpop.f32.mrf.mxu0
    %v221 = vpop.f32.mrf.mxu0
    %222 = vdwg.mxu0
    %v223 = vpack.c.bf16 %v218, %v218
    %v224 = vld [vmem:[%s3] sm:$0xf]
    %v225 = vld [vmem:[%s3 + $0x4] sm:$0xf]
    %v226 = vld [vmem:[%s3 + $0x8] sm:$0xf]
    %v227 = vld [vmem:[%s3 + $0xc] sm:$0xf]
    %v228 = vld [vmem:[%s3 + $0x10] sm:$0xf]
    %v229 = vld [vmem:[%s3 + $0x14] sm:$0xf]
    %v230 = vld [vmem:[%s3 + $0x18] sm:$0xf]
    %v231 = vld [vmem:[%s3 + $0x1c] sm:$0xf]
    %v232 = vld [vmem:[%s3 + $0x20] sm:$0xf]
    %v233 = vld [vmem:[%s3 + $0x24] sm:$0xf]
    %v234 = vld [vmem:[%s3 + $0x28] sm:$0xf]
    %v235 = vld [vmem:[%s3 + $0x2c] sm:$0xf]
    %v236 = vld [vmem:[%s3 + $0x30] sm:$0xf]
    %v237 = vld [vmem:[%s3 + $0x34] sm:$0xf]
    %v238 = vld [vmem:[%s3 + $0x38] sm:$0xf]
    %v239 = vld [vmem:[%s3 + $0x3c] sm:$0xf]
    %v256 = vunpack.c.l.b16 %v224
    %v257 = vunpack.c.l.b16 %v225
    %v258 = vunpack.c.l.b16 %v226
    %v259 = vunpack.c.l.b16 %v227
    %v260 = vunpack.c.l.b16 %v228
    %v261 = vunpack.c.l.b16 %v229
    %v262 = vunpack.c.l.b16 %v230
    %v263 = vunpack.c.l.b16 %v231
    %v264 = vunpack.c.l.b16 %v232
    %v265 = vunpack.c.l.b16 %v233
    %v266 = vunpack.c.l.b16 %v234
    %v267 = vunpack.c.l.b16 %v235
    %v268 = vunpack.c.l.b16 %v236
    %v269 = vunpack.c.l.b16 %v237
    %v270 = vunpack.c.l.b16 %v238
    %v271 = vunpack.c.l.b16 %v239
    %v272 = vpack.c.b16 %v257, %v256
    %v273 = vpack.c.b16 %v259, %v258
    %v274 = vpack.c.b16 %v261, %v260
    %v275 = vpack.c.b16 %v263, %v262
    %v276 = vpack.c.b16 %v265, %v264
    %v277 = vpack.c.b16 %v267, %v266
    %v278 = vpack.c.b16 %v269, %v268
    %v279 = vpack.c.b16 %v271, %v270
    %288 = vmatprep.subr.bf16.mxu0 0
    %289 = vmatpush1.bf16.msra.mxu0 %v279
    %290 = vmatprep.subr.bf16.mxu0 0
    %291 = vmatpush1.bf16.msra.mxu0 %v278
    %292 = vmatprep.subr.bf16.mxu0 0
    %293 = vmatpush1.bf16.msra.mxu0 %v277
    %294 = vmatprep.subr.bf16.mxu0 0
    %295 = vmatpush1.bf16.msra.mxu0 %v276
    %296 = vmatprep.subr.bf16.mxu0 0
    %297 = vmatpush1.bf16.msra.mxu0 %v275
    %298 = vmatprep.subr.bf16.mxu0 0
    %299 = vmatpush1.bf16.msra.mxu0 %v274
    %300 = vmatprep.subr.bf16.mxu0 0
    %301 = vmatpush1.bf16.msra.mxu0 %v273
    %302 = vmatprep.subr.bf16.mxu0 0
    %303 = vmatpush1.bf16.msra.mxu0 %v272
    %304 = vmatprep.subr.bf16.mxu0 0
    %305 = vmatpush2.bf16.msra.mxu0 0
    %306 = vmatprep.subr.bf16.mxu0 0
    %307 = vmatpush2.bf16.msra.mxu0 0
    %308 = vmatprep.subr.bf16.mxu0 0
    %309 = vmatpush2.bf16.msra.mxu0 0
    %310 = vmatprep.subr.bf16.mxu0 0
    %311 = vmatpush2.bf16.msra.mxu0 0
    %312 = vmatprep.subr.bf16.mxu0 0
    %313 = vmatpush2.bf16.msra.mxu0 0
    %314 = vmatprep.subr.bf16.mxu0 0
    %315 = vmatpush2.bf16.msra.mxu0 0
    %316 = vmatprep.subr.bf16.mxu0 0
    %317 = vmatpush2.bf16.msra.mxu0 0
    %318 = vmatprep.subr.bf16.mxu0 0
    %319 = vmatpush2.bf16.msra.mxu0 0
    %320 = vmatprep.mubr.bf16.mxu0 0
    %321 = vmatmul.mubr.bf16.gmra.mxu0 %v223
    %v322 = vpop.f32.mrf.mxu0
    %v323 = vadd.f32 0.0, %v322
    %v324 = vpop.f32.mrf.mxu0
    %v325 = vpop.f32.mrf.mxu0
    %v326 = vpop.f32.mrf.mxu0
    %327 = vdwg.mxu0
    %v328 = vmul.f32 %v323, %v323
    %329 = vadd.xlane.f32.xlu0 %v328
    %v330 = vpop.xlane.xlu0 %329
    %v331 = vadd.f32 %v330, 1e-12
    %v332 = vrsqrt.pop %v331
    %v333 = vmul.f32 %v323, %v332
    %334 = vst [vmem:[#allocation9] sm:$0xff] %v333
    %v335 = vld [vmem:[#allocation10] sm:$0xff]
    %v336 = vpack.c.bf16 %v333, %v333
    %v337 = vpack.c.bf16 %v335, %v335
    %338 = vmatprep.subr.bf16.mxu0 0
    %339 = vmatpush1.bf16.xpose.msra.mxu0 0
    %340 = vmatprep.subr.bf16.mxu0 0
    %341 = vmatpush1.bf16.xpose.msra.mxu0 0
    %342 = vmatprep.subr.bf16.mxu0 0
    %343 = vmatpush1.bf16.xpose.msra.mxu0 0
    %344 = vmatprep.subr.bf16.mxu0 0
    %345 = vmatpush1.bf16.xpose.msra.mxu0 0
    %346 = vmatprep.subr.bf16.mxu0 0
    %347 = vmatpush1.bf16.xpose.msra.mxu0 0
    %348 = vmatprep.subr.bf16.mxu0 0
    %349 = vmatpush1.bf16.xpose.msra.mxu0 0
    %350 = vmatprep.subr.bf16.mxu0 0
    %351 = vmatpush1.bf16.xpose.msra.mxu0 0
    %352 = vmatprep.subr.bf16.mxu0 0
    %353 = vmatpush1.bf16.xpose.msra.mxu0 %v337
    %354 = vmatprep.subr.bf16.mxu0 0
    %355 = vmatpush2.bf16.xpose.msra.mxu0 0
    %356 = vmatprep.subr.bf16.mxu0 0
    %357 = vmatpush2.bf16.xpose.msra.mxu0 0
    %358 = vmatprep.subr.bf16.mxu0 0
    %359 = vmatpush2.bf16.xpose.msra.mxu0 0
    %360 = vmatprep.subr.bf16.mxu0 0
    %361 = vmatpush2.bf16.xpose.msra.mxu0 0
    %362 = vmatprep.subr.bf16.mxu0 0
    %363 = vmatpush2.bf16.xpose.msra.mxu0 0
    %364 = vmatprep.subr.bf16.mxu0 0
    %365 = vmatpush2.bf16.xpose.msra.mxu0 0
    %366 = vmatprep.subr.bf16.mxu0 0
    %367 = vmatpush2.bf16.xpose.msra.mxu0 0
    %368 = vmatprep.subr.bf16.mxu0 0
    %369 = vmatpush2.bf16.xpose.msra.mxu0 0
    %370 = vmatprep.mubr.bf16.mxu0 0
    %371 = vmatmul.mubr.bf16.gmra.mxu0 %v336
    %v372 = vpop.f32.mrf.mxu0
    %v373 = vadd.f32 0.0, %v372
    %v374 = vpop.f32.mrf.mxu0
    %v375 = vpop.f32.mrf.mxu0
    %v376 = vpop.f32.mrf.mxu0
    %377 = vdwg.mxu0
    %v378 = vstv %s32
    %v379 = vmul.f32 %v378, %v373
    %vm380 = vcmask 64512
    %381 = vst.msk [vmem:[%s7] sm:$0xff] %vm380, %v379
    %s382 = smul.u32 0, 8
    %s383 = scalar_lea.vmem [#allocation10], %s382
    %v384 = vld [vmem:[%s383] sm:$0xff]
    %v385 = vmul.f32 %v333, %v384
    %386 = vadd.xlane.f32.xlu0 %v385
    %v387 = vpop.xlane.xlu0 %386
    %v388 = vmul.f32 %v378, %v387
    %v389 = vsel %vm380, %v379, -inf
    %390 = vmax.xlane.f32.xlu0 %v389
    %v391 = vpop.xlane.xlu0 %390
    %v392 = vsub.f32 %v379, %v391
    %v393 = vmul.f32 %v392, 1.442695
    %v394 = vpow.pop %v393
    %v395 = vsel %vm380, %v394, 0.0
    %396 = vadd.xlane.f32.xlu0 %v395
    %v397 = vpop.xlane.xlu0 %396
    %v398 = vlog2.pop %v397
    %v399 = vmul.f32 %v398, 0.6931472
    %v400 = vadd.f32 %v391, %v399
    %s401 = sld [smem:[#allocation4]]
    %vm402 = vcmask 7168
    %v403 = vsel %vm402, %v400, 0.0
    %404 = vadd.xlane.f32.xlu0 %v403
    %v405 = vpop.xlane.xlu0 %404
    %v406 = vrot.slane %v405, 4
    %v407 = vadd.f32 %v405, %v406
    %v408 = vrot.slane %v407, 2
    %v409 = vadd.f32 %v407, %v408
    %v410 = vrot.slane %v409, 1
    %v411 = vadd.f32 %v409, %v410
    %s412 = vtos %v411
    %s413 = smul.f32 %s412, 0.5
    %s414 = sadd.f32 %s401, %s413
    %v415 = vsel %vm402, %v388, 0.0
    %416 = vadd.xlane.f32.xlu0 %v415
    %v417 = vpop.xlane.xlu0 %416
    %v418 = vrot.slane %v417, 4
    %v419 = vadd.f32 %v417, %v418
    %v420 = vrot.slane %v419, 2
    %v421 = vadd.f32 %v419, %v420
    %v422 = vrot.slane %v421, 1
    %v423 = vadd.f32 %v421, %v422
    %s424 = vtos %v423
    %s425 = ssub.f32 %s414, %s424
    %s426 = scalar_lea.smem [#allocation4], 0
    %427 = sst [smem:[%s426]] %s425
    %v428 = vrot.slane %v389, 4
    %v429 = vmax.f32 %v389, %v428
    %v430 = vrot.slane %v429, 2
    %v431 = vmax.f32 %v429, %v430
    %v432 = vrot.slane %v431, 1
    %v433 = vmax.f32 %v431, %v432
    %v434 = vld [vmem:[#allocation2] sm:$0x1]
    %v435 = vmax.f32 %v434, %v433
    %v436 = vld [vmem:[#allocation3] sm:$0x1]
    %v437 = vsub.f32 %v434, %v435
    %v438 = vmul.f32 %v437, 1.442695
    %v439 = vpow.pop %v438
    %v440 = vmul.f32 %v436, %v439
    %v442 = vlaneseq
    %v443 = vshrl.u32 %v442, 7
    %v444 = vsub.s32 0, %v443
    %v445 = vrot.slane %v435, %v444
    %v447 = vsub.f32 %v379, %v445
    %v448 = vmul.f32 %v447, 1.442695
    %v449 = vpow.pop %v448
    %v450 = vsel %vm380, %v449, 0.0
    %v451 = vrot.slane %v450, 4
    %v452 = vadd.f32 %v450, %v451
    %v453 = vrot.slane %v452, 2
    %v454 = vadd.f32 %v452, %v453
    %v455 = vrot.slane %v454, 1
    %v456 = vadd.f32 %v454, %v455
    %v457 = vadd.f32 %v440, %v456
    %vm458 = vcmask 57344
    %459 = vst.msk [vmem:[#allocation3] sm:$0x1] %vm458, %v457
    %460 = vst.msk [vmem:[#allocation2] sm:$0x1] %vm458, %v435
    // Predicated region
    $region30: #{clipall_forward.1} parent=1 // pred_check
      %p461 = pneg %p33
    $region31: #{clipall_forward.1} parent=1 // pred_check_branch
      %463 = sbr.rel (%p461) target = $region33
    $region32: #{clipall_forward.1} parent=1 // pred_region
      %v464 = vld [vmem:[#allocation2] sm:$0x1]
      %v465 = vld [vmem:[#allocation3] sm:$0x1]
      %v466 = vlog2.pop %v465
      %v467 = vmul.f32 %v466, 0.6931472
      %v468 = vadd.f32 %v464, %v467
      %s469 = sld [smem:[#allocation4]]
      %v470 = vsel %vm458, %v468, 0.0
      %471 = vadd.xlane.f32.xlu0 %v470
      %v472 = vpop.xlane.xlu0 %471
      %v473 = vrot.slane %v472, 4
      %v474 = vadd.f32 %v472, %v473
      %v475 = vrot.slane %v474, 2
      %v476 = vadd.f32 %v474, %v475
      %v477 = vrot.slane %v476, 1
      %v478 = vadd.f32 %v476, %v477
      %s479 = vtos %v478
      %s480 = smul.f32 %s479, 0.5
      %s481 = sadd.f32 %s469, %s480
      %v482 = vrcp.pop 8.0
      %s483 = vtos %v482
      %s484 = smul.f32 %s481, %s483
      %s485 = scalar_lea.smem [#allocation6], 0
      %486 = sst [smem:[%s485]] %s484
    $region33: #{clipall_forward.1} parent=1 // pred_fallthru
      _
    // Predicated region
    $region34: #{clipall_forward.1} parent=1 // pred_check
      _
    $region35: #{clipall_forward.1} parent=1 // pred_check_branch
      %488 = sbr.rel (0) target = $region37
    $region36: #{clipall_forward.1} parent=1 // pred_region
      %s490 = ssub.s32 16, 16
      %491 = vsyncadd [#allocation8], %s490
      %494 = dma.smem_to_hbm [#allocation6], 16, %s6, [#allocation8]
    $region37: #{clipall_forward.1} parent=1 // pred_fallthru
      _
    // Predicated region
    $region38: #{clipall_forward.1} parent=1 // pred_check
      _
    $region39: #{clipall_forward.1} parent=1 // pred_check_branch
      %496 = sbr.rel (0) target = $region41
    $region40: #{clipall_forward.1} parent=1 // pred_region
      _
    $region41: #{clipall_forward.1} parent=1 // pred_fallthru
      _
    // Predicated region
    $region42: #{clipall_forward.1} parent=1 // pred_check
      _
    $region43: #{clipall_forward.1} parent=1 // pred_check_branch
      %498 = sbr.rel (0) target = $region45
    $region44: #{clipall_forward.1} parent=1 // pred_region
      %s500 = ssub.s32 128, 128
      %501 = vsyncadd [#allocation7], %s500
      %s503 = sshll.u32 [#allocation9], 4
      %s504 = int_to_ptr.vmem [resolvable:$true] %s503
      %506 = dma.vmem_to_hbm [thread:$0]  %s504, 128, %s8, [#allocation7]
    $region45: #{clipall_forward.1} parent=1 // pred_fallthru
      _
    // Predicated region
    $region46: #{clipall_forward.1} parent=1 // pred_check
      _
    $region47: #{clipall_forward.1} parent=1 // pred_check_branch
      %508 = sbr.rel (0) target = $region49
    $region48: #{clipall_forward.1} parent=1 // pred_region
      %s510 = ssub.s32 128, 128
      %511 = vsyncadd [#allocation11], %s510
      %s513 = sshll.u32 [#allocation10], 4
      %s514 = int_to_ptr.vmem [resolvable:$true] %s513
      %516 = dma.vmem_to_hbm [thread:$0]  %s514, 128, %s9, [#allocation11]
    $region49: #{clipall_forward.1} parent=1 // pred_fallthru
      _
    // Predicated region
    $region50: #{clipall_forward.1} parent=1 // pred_check
      _
    $region51: #{clipall_forward.1} parent=1 // pred_check_branch
      %518 = sbr.rel (0) target = $region53
    $region52: #{clipall_forward.1} parent=1 // pred_region
      %519 = dma.done [#allocation8], 16
    $region53: #{clipall_forward.1} parent=1 // pred_fallthru
      _
    // Predicated region
    $region54: #{clipall_forward.1} parent=1 // pred_check
      _
    $region55: #{clipall_forward.1} parent=1 // pred_check_branch
      %521 = sbr.rel (0) target = $region57
    $region56: #{clipall_forward.1} parent=1 // pred_region
      _
    $region57: #{clipall_forward.1} parent=1 // pred_fallthru
      _
    // Predicated region
    $region58: #{clipall_forward.1} parent=1 // pred_check
      _
    $region59: #{clipall_forward.1} parent=1 // pred_check_branch
      %523 = sbr.rel (0) target = $region61
    $region60: #{clipall_forward.1} parent=1 // pred_region
      %524 = dma.done [#allocation7], 128
    $region61: #{clipall_forward.1} parent=1 // pred_fallthru
      _
    // Predicated region
    $region62: #{clipall_forward.1} parent=1 // pred_check
      _
    $region63: #{clipall_forward.1} parent=1 // pred_check_branch
      %526 = sbr.rel (0) target = $region65
    $region64: #{clipall_forward.1} parent=1 // pred_region
      %527 = dma.done [#allocation11], 128
    $region65: #{clipall_forward.1} parent=1 // pred_fallthru
      _
    %528 = sfence
    %529 = vsyncpa [#allocation7], 1
    %530 = vsyncpa [#allocation11], 1
    %531 = vsyncpa [#allocation8], 1

</llo_original>
